<compile_context>
chip_gen: v5e
topology: v5e:2x2
jax: 0.10.0
libtpu: 0.0.40
codegen_flags: <defaults>
</compile_context>

<pallas_src>
import functools

import jax
import jax.numpy as jnp
from jax import lax
from jax.experimental import pallas as pl
from jax.experimental.pallas import tpu as pltpu


# ---------------------------------------------------------------------------
# Kernel
# ---------------------------------------------------------------------------
def _linear_stack_kernel(a_ref, bp_ref, bq_ref, p_ref, q_ref,
                         p_out_ref, q_out_ref, s_ref, *,
                         num_layers, use_scratch_sym, unroll_threshold=8):
    """One batch tile through the whole L-layer stack.

    a_ref : (L, D, D) resident weight stack (single-buffered).
    s_ref : (D, D) VMEM scratch holding the symmetrized S_l = A_l + A_l^T.
    """
    w_dtype = a_ref.dtype
    p = p_ref[...].astype(jnp.float32)
    q = q_ref[...].astype(jnp.float32)

    def sym_apply(x, l):
        """x @ (A_l + A_l^T), accumulated in f32 on the MXU."""
        A = a_ref[l]                               # (D, D), static or dynamic l
        xw = x.astype(w_dtype)
        if use_scratch_sym:
            # One MXU matmul per layer against an explicitly symmetrized S_l
            # kept in VMEM scratch (halves MXU work vs. the A / A^T pair).
            # Symmetrization happens every grid step -> safe under megacore
            # 'parallel' sharding (no program_id==0 guard).
            s_ref[...] = A + A.T
            return jnp.dot(xw, s_ref[...], preferred_element_type=jnp.float32)
        # Degenerate tiny-batch tiles: two exact matmuls (A and A^T paths).
        y = jnp.dot(xw, A, preferred_element_type=jnp.float32)
        y = y + lax.dot_general(
            xw, A,
            dimension_numbers=(((1,), (1,)), ((), ())),   # x @ A^T
            preferred_element_type=jnp.float32)
        return y

    if num_layers <= unroll_threshold:
        # Small stacks: static unroll keeps everything visible to the
        # LLO scheduler.
        for l in range(num_layers):
            if l % 2 == 0:                         # 'upper'
                p = p + sym_apply(q, l)
            else:                                  # 'lower'
                q = q + sym_apply(p, l)
    else:
        # Large stacks: bounded fori_loop over (upper, lower) pairs; unroll=2
        # lets layer l+1's symmetrization (XLU/VPU) overlap layer l's MXU.
        n_pairs = num_layers // 2

        def body(k, carry):
            pc, qc = carry
            pc = pc + sym_apply(qc, 2 * k)
            qc = qc + sym_apply(pc, 2 * k + 1)
            return (pc, qc)

        p, q = lax.fori_loop(0, n_pairs, body, (p, q), unroll=2)
        if num_layers % 2 == 1:                    # trailing odd 'upper' layer
            p = p + sym_apply(q, num_layers - 1)

    p_out_ref[...] = (p + bp_ref[...].astype(jnp.float32)).astype(p_out_ref.dtype)
    q_out_ref[...] = (q + bq_ref[...].astype(jnp.float32)).astype(q_out_ref.dtype)


# ---------------------------------------------------------------------------
# Generation-aware budgeting / tiling
# ---------------------------------------------------------------------------
def _tpu_budget():
    """Best-effort (vmem_budget_bytes, tensorcores_per_chip)."""
    physical_vmem = 128 << 20          # v5e / v6e default
    num_cores = 1
    try:
        info = pltpu.get_tpu_info()
        v = getattr(info, "vmem_capacity_bytes", None)
        if v:
            physical_vmem = int(v)
    except Exception:
        pass
    try:
        kind = jax.devices()[0].device_kind.lower()
        if ("v4" in kind) or ("v5p" in kind) or ("v7" in kind):
            num_cores = 2              # megacore / dual-TensorCore chips
    except Exception:
        pass
    if physical_vmem <= (64 << 20):
        # v7x: never request the whole 64 MiB; leave compiler-scratch headroom.
        budget = physical_vmem - (12 << 20)
    else:
        # v5e / v6e: 128 MiB physical -> allow up to ~100 MiB.
        budget = min(physical_vmem - (28 << 20), 100 << 20)
    return max(budget, 16 << 20), num_cores


def _pick_batch_tile(B, D, resident_bytes, vmem_budget, num_cores):
    """Largest legal batch tile given the real VMEM footprint.

    p/q in+out tiles are double-buffered f32 (8 * tile * D * 4 bytes) and must
    fit next to the resident (single-buffered) weight stack.  On dual-TC chips
    with a big enough batch, prefer exactly two tiles so the 'parallel' grid
    axis feeds both TensorCores; on single-TC chips a single tile is strictly
    better (the grid is a serial loop there).
    """
    per_row = 8 * D * 4                         # p,q x (in+out) x 2 buffers, f32
    free = vmem_budget - resident_bytes - (1 << 20)
    max_rows = free // per_row if free > 0 else 0

    def fits(t):
        return 0 < t <= max_rows

    if num_cores >= 2 and B >= 256 and (B // 2) % 8 == 0 and fits(B // 2):
        return B // 2                           # two big tiles, one per core
    if fits(B):
        return B                                # single largest tile
    # Shrink: largest multiple-of-8 divisor of B that fits the budget.
    t = (max_rows // 8) * 8
    while t >= 8:
        if B % t == 0:
            return t
        t -= 8
    return min(B, 8)


# ---------------------------------------------------------------------------
# Wrapper
# ---------------------------------------------------------------------------
def linear_stack_forward(p, q, A_stack, b_p, b_q, *,
                         batch_tile=None, weights_dtype=None):
    """Run the LinearStack forward pass with a Pallas TPU kernel.

    p, q        : (B, D)
    A_stack     : (L, D, D) raw A parameters (one per sublayer)
    b_p, b_q    : (D,)
    weights_dtype: optional MXU-operand dtype (e.g. jnp.bfloat16) — runs the
      matmuls at bf16 MXU rate and halves resident weight VMEM; accumulation,
      residual and bias adds stay f32.  Default keeps the input dtype.
    """
    B, D = p.shape
    L = A_stack.shape[0]

    w_dtype = jnp.dtype(weights_dtype) if weights_dtype is not None else jnp.dtype(A_stack.dtype)
    A_stack = A_stack.astype(w_dtype)

    vmem_budget, num_cores = _tpu_budget()

    w_bytes = L * D * D * w_dtype.itemsize       # single-buffered weight stack
    s_bytes = D * D * w_dtype.itemsize           # S_l scratch
    bias_bytes = 2 * D * 4                       # b_p, b_q (single-buffered)
    resident_bytes = w_bytes + s_bytes + bias_bytes

    if batch_tile is None:
        batch_tile = _pick_batch_tile(B, D, resident_bytes, vmem_budget, num_cores)
    assert B % batch_tile == 0, "B must be a multiple of batch_tile"
    assert batch_tile == B or batch_tile % 8 == 0, \
        "batch_tile must equal B or be a multiple of 8 (sublane constraint)"

    use_scratch_sym = batch_tile >= 16

    io_bytes = 8 * batch_tile * D * 4            # p,q in+out tiles, 2 buffers each
    vmem_limit = int(min(max(resident_bytes + io_bytes + (2 << 20), 16 << 20),
                         vmem_budget))

    # Cost hint: one (B,D)x(D,D) matmul per layer (two if on the tiny-tile path).
    macs = B * D * D * L * (1 if use_scratch_sym else 2)
    cost = pl.CostEstimate(
        flops=2 * macs,
        transcendentals=0,
        bytes_accessed=int(w_bytes + 4 * B * D * 4 + bias_bytes))

    bp2 = b_p.reshape(1, D)
    bq2 = b_q.reshape(1, D)

    kernel = functools.partial(_linear_stack_kernel, num_layers=L,
                               use_scratch_sym=use_scratch_sym)

    grid = (B // batch_tile,)
    p_out, q_out = pl.pallas_call(
        kernel,
        out_shape=(
            jax.ShapeDtypeStruct((B, D), p.dtype),
            jax.ShapeDtypeStruct((B, D), q.dtype),
        ),
        grid_spec=pltpu.PrefetchScalarGridSpec(
            num_scalar_prefetch=0,
            grid=grid,
            in_specs=[
                # Constant-index blocks: single-buffer them (nothing to
                # prefetch), halving their resident VMEM footprint.
                pl.BlockSpec((L, D, D), lambda i: (0, 0, 0),
                             pipeline_mode=pl.Buffered(1)),        # A stack
                pl.BlockSpec((1, D), lambda i: (0, 0),
                             pipeline_mode=pl.Buffered(1)),        # b_p
                pl.BlockSpec((1, D), lambda i: (0, 0),
                             pipeline_mode=pl.Buffered(1)),        # b_q
                pl.BlockSpec((batch_tile, D), lambda i: (i, 0)),   # p tile
                pl.BlockSpec((batch_tile, D), lambda i: (i, 0)),   # q tile
            ],
            out_specs=[
                pl.BlockSpec((batch_tile, D), lambda i: (i, 0)),
                pl.BlockSpec((batch_tile, D), lambda i: (i, 0)),
            ],
            scratch_shapes=[pltpu.VMEM((D, D), w_dtype)],          # S_l scratch
        ),
        compiler_params=pltpu.CompilerParams(
            dimension_semantics=("parallel",),
            vmem_limit_bytes=vmem_limit),
        cost_estimate=cost,
    )(A_stack, bp2, bq2, p, q)
    return p_out, q_out


# ---------------------------------------------------------------------------
# Pure-JAX reference mirroring the PyTorch forward exactly
# ---------------------------------------------------------------------------
def linear_stack_reference(p, q, A_stack, b_p, b_q):
    L = A_stack.shape[0]
    for l in range(L):
        S = A_stack[l] + A_stack[l].T
        if l % 2 == 0:       # 'upper'
            p = p + q @ S
        else:                # 'lower'
            q = p @ S + q
    return p + b_p, q + b_q


if __name__ == "__main__":
    key = jax.random.PRNGKey(0)

    def run_case(B, D, L, case_key, a_scale=1.0):
        k_A, k_bp, k_bq, k_p, k_q = jax.random.split(case_key, 5)
        A_stack = a_scale * jax.random.normal(k_A, (L, D, D), dtype=jnp.float32)
        b_p = jax.random.normal(k_bp, (D,), dtype=jnp.float32)
        b_q = jax.random.normal(k_bq, (D,), dtype=jnp.float32)
        p = jax.random.normal(k_p, (B, D), dtype=jnp.float32)
        q = jax.random.normal(k_q, (B, D), dtype=jnp.float32)

        p_out, q_out = linear_stack_forward(p, q, A_stack, b_p, b_q)
        jax.block_until_ready((p_out, q_out))

        p_ref, q_ref = linear_stack_reference(p, q, A_stack, b_p, b_q)
        assert jnp.allclose(p_out, p_ref, atol=1e-4, rtol=1e-4)
        assert jnp.allclose(q_out, q_ref, atol=1e-4, rtol=1e-4)

    k1, k2 = jax.random.split(key)
    # Small shapes consistent with the module (dim=32, sublayers=4).  The
    # batch of 32 gives a >=16-row tile -> single-matmul path against the
    # symmetrized S scratch (the main perf change).
    run_case(B=32, D=32, L=4, case_key=k1)
    # Larger layer count exercises the fori_loop(unroll=2) layer-pair path
    # with dynamic layer indexing (weights scaled to keep magnitudes tame).
    run_case(B=16, D=32, L=10, case_key=k2, a_scale=0.1)

    print("KERNEL_OK")
</pallas_src>

<mosaic_0001>
module attributes {stable_mosaic.version = 11 : i64} {
  func.func @_linear_stack_kernel(%arg0: i32, %arg1: memref<4x32x32xf32, #tpu.memory_space<vmem>>, %arg2: memref<1x32xf32, #tpu.memory_space<vmem>>, %arg3: memref<1x32xf32, #tpu.memory_space<vmem>>, %arg4: memref<32x32xf32, #tpu.memory_space<vmem>>, %arg5: memref<32x32xf32, #tpu.memory_space<vmem>>, %arg6: memref<32x32xf32, #tpu.memory_space<vmem>>, %arg7: memref<32x32xf32, #tpu.memory_space<vmem>>, %arg8: memref<32x32xf32, #tpu.memory_space<vmem>>) attributes {dimension_semantics = [#tpu.dimension_semantics<parallel>], iteration_bounds = array<i64: 1>, scalar_prefetch = 0 : i64, scratch_operands = 1 : i64, tpu.core_type = #tpu.core_type<tc>, window_params = [{pipeline_mode = #tpu.pipeline_mode<synchronous>, transform_indices = @transform_0, window_bounds = array<i64: 4, 32, 32>}, {pipeline_mode = #tpu.pipeline_mode<synchronous>, transform_indices = @transform_1, window_bounds = array<i64: 1, 32>}, {pipeline_mode = #tpu.pipeline_mode<synchronous>, transform_indices = @transform_2, window_bounds = array<i64: 1, 32>}, {transform_indices = @transform_3, window_bounds = array<i64: 32, 32>}, {transform_indices = @transform_4, window_bounds = array<i64: 32, 32>}, {transform_indices = @transform_5, window_bounds = array<i64: 32, 32>}, {transform_indices = @transform_6, window_bounds = array<i64: 32, 32>}]} {
    %c0 = arith.constant 0 : index
    %c0_0 = arith.constant 0 : index
    %0 = vector.load %arg4[%c0, %c0_0] : memref<32x32xf32, #tpu.memory_space<vmem>>, vector<32x32xf32>
    %c0_1 = arith.constant 0 : index
    %c0_2 = arith.constant 0 : index
    %1 = vector.load %arg5[%c0_1, %c0_2] : memref<32x32xf32, #tpu.memory_space<vmem>>, vector<32x32xf32>
    %c0_3 = arith.constant 0 : index
    %c0_4 = arith.constant 0 : index
    %c0_5 = arith.constant 0 : index
    %2 = vector.load %arg1[%c0_3, %c0_4, %c0_5] : memref<4x32x32xf32, #tpu.memory_space<vmem>>, vector<1x32x32xf32>
    %3 = vector.shape_cast %2 : vector<1x32x32xf32> to vector<32x32xf32>
    %4 = tpu.transpose %3, [1, 0] : vector<32x32xf32> -> vector<32x32xf32>
    %5 = arith.addf %3, %4 : vector<32x32xf32>
    %c0_6 = arith.constant 0 : index
    %c0_7 = arith.constant 0 : index
    %6 = vector.load %arg8[%c0_6, %c0_7] : memref<32x32xf32, #tpu.memory_space<vmem>>, vector<32x32xf32>
    tpu.vector_store %arg8[%c0_6, %c0_7], %5 {strides = array<i32>} : memref<32x32xf32, #tpu.memory_space<vmem>>, vector<32x32xf32>,
    %c0_8 = arith.constant 0 : index
    %c0_9 = arith.constant 0 : index
    %7 = vector.load %arg8[%c0_8, %c0_9] : memref<32x32xf32, #tpu.memory_space<vmem>>, vector<32x32xf32>
    %cst = arith.constant dense<0.000000e+00> : vector<32x32xf32>
    %8 = tpu.matmul %1, %7, %cst {dimension_numbers = #tpu.dot_dimension_numbers<[1], [0], [0], [1], [0, 0, 1, 1], [], []>} : vector<32x32xf32>, vector<32x32xf32>, vector<32x32xf32> -> vector<32x32xf32>
    %9 = arith.addf %0, %8 : vector<32x32xf32>
    %c1 = arith.constant 1 : index
    %c0_10 = arith.constant 0 : index
    %c0_11 = arith.constant 0 : index
    %10 = vector.load %arg1[%c1, %c0_10, %c0_11] : memref<4x32x32xf32, #tpu.memory_space<vmem>>, vector<1x32x32xf32>
    %11 = vector.shape_cast %10 : vector<1x32x32xf32> to vector<32x32xf32>
    %12 = tpu.transpose %11, [1, 0] : vector<32x32xf32> -> vector<32x32xf32>
    %13 = arith.addf %11, %12 : vector<32x32xf32>
    %c0_12 = arith.constant 0 : index
    %c0_13 = arith.constant 0 : index
    %14 = vector.load %arg8[%c0_12, %c0_13] : memref<32x32xf32, #tpu.memory_space<vmem>>, vector<32x32xf32>
    tpu.vector_store %arg8[%c0_12, %c0_13], %13 {strides = array<i32>} : memref<32x32xf32, #tpu.memory_space<vmem>>, vector<32x32xf32>,
    %c0_14 = arith.constant 0 : index
    %c0_15 = arith.constant 0 : index
    %15 = vector.load %arg8[%c0_14, %c0_15] : memref<32x32xf32, #tpu.memory_space<vmem>>, vector<32x32xf32>
    %cst_16 = arith.constant dense<0.000000e+00> : vector<32x32xf32>
    %16 = tpu.matmul %9, %15, %cst_16 {dimension_numbers = #tpu.dot_dimension_numbers<[1], [0], [0], [1], [0, 0, 1, 1], [], []>} : vector<32x32xf32>, vector<32x32xf32>, vector<32x32xf32> -> vector<32x32xf32>
    %17 = arith.addf %1, %16 : vector<32x32xf32>
    %c2 = arith.constant 2 : index
    %c0_17 = arith.constant 0 : index
    %c0_18 = arith.constant 0 : index
    %18 = vector.load %arg1[%c2, %c0_17, %c0_18] : memref<4x32x32xf32, #tpu.memory_space<vmem>>, vector<1x32x32xf32>
    %19 = vector.shape_cast %18 : vector<1x32x32xf32> to vector<32x32xf32>
    %20 = tpu.transpose %19, [1, 0] : vector<32x32xf32> -> vector<32x32xf32>
    %21 = arith.addf %19, %20 : vector<32x32xf32>
    %c0_19 = arith.constant 0 : index
    %c0_20 = arith.constant 0 : index
    %22 = vector.load %arg8[%c0_19, %c0_20] : memref<32x32xf32, #tpu.memory_space<vmem>>, vector<32x32xf32>
    tpu.vector_store %arg8[%c0_19, %c0_20], %21 {strides = array<i32>} : memref<32x32xf32, #tpu.memory_space<vmem>>, vector<32x32xf32>,
    %c0_21 = arith.constant 0 : index
    %c0_22 = arith.constant 0 : index
    %23 = vector.load %arg8[%c0_21, %c0_22] : memref<32x32xf32, #tpu.memory_space<vmem>>, vector<32x32xf32>
    %cst_23 = arith.constant dense<0.000000e+00> : vector<32x32xf32>
    %24 = tpu.matmul %17, %23, %cst_23 {dimension_numbers = #tpu.dot_dimension_numbers<[1], [0], [0], [1], [0, 0, 1, 1], [], []>} : vector<32x32xf32>, vector<32x32xf32>, vector<32x32xf32> -> vector<32x32xf32>
    %25 = arith.addf %9, %24 : vector<32x32xf32>
    %c3 = arith.constant 3 : index
    %c0_24 = arith.constant 0 : index
    %c0_25 = arith.constant 0 : index
    %26 = vector.load %arg1[%c3, %c0_24, %c0_25] : memref<4x32x32xf32, #tpu.memory_space<vmem>>, vector<1x32x32xf32>
    %27 = vector.shape_cast %26 : vector<1x32x32xf32> to vector<32x32xf32>
    %28 = tpu.transpose %27, [1, 0] : vector<32x32xf32> -> vector<32x32xf32>
    %29 = arith.addf %27, %28 : vector<32x32xf32>
    %c0_26 = arith.constant 0 : index
    %c0_27 = arith.constant 0 : index
    %30 = vector.load %arg8[%c0_26, %c0_27] : memref<32x32xf32, #tpu.memory_space<vmem>>, vector<32x32xf32>
    tpu.vector_store %arg8[%c0_26, %c0_27], %29 {strides = array<i32>} : memref<32x32xf32, #tpu.memory_space<vmem>>, vector<32x32xf32>,
    %c0_28 = arith.constant 0 : index
    %c0_29 = arith.constant 0 : index
    %31 = vector.load %arg8[%c0_28, %c0_29] : memref<32x32xf32, #tpu.memory_space<vmem>>, vector<32x32xf32>
    %cst_30 = arith.constant dense<0.000000e+00> : vector<32x32xf32>
    %32 = tpu.matmul %25, %31, %cst_30 {dimension_numbers = #tpu.dot_dimension_numbers<[1], [0], [0], [1], [0, 0, 1, 1], [], []>} : vector<32x32xf32>, vector<32x32xf32>, vector<32x32xf32> -> vector<32x32xf32>
    %33 = arith.addf %17, %32 : vector<32x32xf32>
    %c0_31 = arith.constant 0 : index
    %c0_32 = arith.constant 0 : index
    %34 = vector.load %arg2[%c0_31, %c0_32] : memref<1x32xf32, #tpu.memory_space<vmem>>, vector<1x32xf32>
    %35 = vector.broadcast %34 : vector<1x32xf32> to vector<32x32xf32>
    %36 = arith.addf %25, %35 : vector<32x32xf32>
    %c0_33 = arith.constant 0 : index
    %c0_34 = arith.constant 0 : index
    %37 = vector.load %arg6[%c0_33, %c0_34] : memref<32x32xf32, #tpu.memory_space<vmem>>, vector<32x32xf32>
    tpu.vector_store %arg6[%c0_33, %c0_34], %36 {strides = array<i32>} : memref<32x32xf32, #tpu.memory_space<vmem>>, vector<32x32xf32>,
    %c0_35 = arith.constant 0 : index
    %c0_36 = arith.constant 0 : index
    %38 = vector.load %arg3[%c0_35, %c0_36] : memref<1x32xf32, #tpu.memory_space<vmem>>, vector<1x32xf32>
    %39 = vector.broadcast %38 : vector<1x32xf32> to vector<32x32xf32>
    %40 = arith.addf %33, %39 : vector<32x32xf32>
    %c0_37 = arith.constant 0 : index
    %c0_38 = arith.constant 0 : index
    %41 = vector.load %arg7[%c0_37, %c0_38] : memref<32x32xf32, #tpu.memory_space<vmem>>, vector<32x32xf32>
    tpu.vector_store %arg7[%c0_37, %c0_38], %40 {strides = array<i32>} : memref<32x32xf32, #tpu.memory_space<vmem>>, vector<32x32xf32>,
    return
  }
  func.func @transform_0(%arg0: i32) -> (i32, i32, i32) {
    %c0_i32 = arith.constant 0 : i32
    %c0_i32_0 = arith.constant 0 : i32
    %c0_i32_1 = arith.constant 0 : i32
    %c0_i32_2 = arith.constant 0 : i32
    return %c0_i32, %c0_i32_0, %c0_i32_1 : i32, i32, i32
  }
  func.func @transform_1(%arg0: i32) -> (i32, i32) {
    %c0_i32 = arith.constant 0 : i32
    %c0_i32_0 = arith.constant 0 : i32
    %c0_i32_1 = arith.constant 0 : i32
    return %c0_i32, %c0_i32_0 : i32, i32
  }
  func.func @transform_2(%arg0: i32) -> (i32, i32) {
    %c0_i32 = arith.constant 0 : i32
    %c0_i32_0 = arith.constant 0 : i32
    %c0_i32_1 = arith.constant 0 : i32
    return %c0_i32, %c0_i32_0 : i32, i32
  }
  func.func @transform_3(%arg0: i32) -> (i32, i32) {
    %c0_i32 = arith.constant 0 : i32
    %c0_i32_0 = arith.constant 0 : i32
    return %arg0, %c0_i32 : i32, i32
  }
  func.func @transform_4(%arg0: i32) -> (i32, i32) {
    %c0_i32 = arith.constant 0 : i32
    %c0_i32_0 = arith.constant 0 : i32
    return %arg0, %c0_i32 : i32, i32
  }
  func.func @transform_5(%arg0: i32) -> (i32, i32) {
    %c0_i32 = arith.constant 0 : i32
    %c0_i32_0 = arith.constant 0 : i32
    return %arg0, %c0_i32 : i32, i32
  }
  func.func @transform_6(%arg0: i32) -> (i32, i32) {
    %c0_i32 = arith.constant 0 : i32
    %c0_i32_0 = arith.constant 0 : i32
    return %arg0, %c0_i32 : i32, i32
  }
}

</mosaic_0001>

<llo_original>
// kernel: tpu_custom_call.1
$region0: #{tpu_custom_call.1}
  #allocation0 [shape = 'u32[]', space=smem, size = 0x4, offset = 0x4, fixed_abs, tag = 'smem constant byte address 0x4 - core index']
  #allocation1 [shape = 'u32[72,128]{1,0:T(1,128)}', space=vmem, size = 0x9000, scoped, tag = 'internal scratch']
  #allocation2 [shape = 'f32[32,32]{1,0:T(8,128)}', space=vmem, size = 0x4000, scoped, tag = 'scratch operand']
  %s0 = inlined_call_operand.hbm [shape: f32[4,32,32], index: 0, kind: input, shape index: {}]
  %s1 = inlined_call_operand.hbm [shape: f32[1,32], index: 1, kind: input, shape index: {}]
  %s2 = inlined_call_operand.vmem [shape: f32[1,32], index: 2, kind: input, shape index: {}]
  %s3 = inlined_call_operand.hbm [shape: f32[32,32], index: 3, kind: input, shape index: {}]
  %s4 = inlined_call_operand.hbm [shape: f32[32,32], index: 4, kind: input, shape index: {}]
  %s5 = inlined_call_operand.hbm [shape: f32[32,32], index: 5, kind: output, shape index: {0}]
  %s6 = inlined_call_operand.hbm [shape: f32[32,32], index: 6, kind: output, shape index: {1}]
  %7 = xla_tuple %s5, %s6
  %s8 = sld [smem:[#allocation0]]
  $region54: #{tpu_custom_call.1} parent=0
    _
  %s10 = ssub.s32 1, %s8
  %s11 = scalar_select 0, %s10, %s8
  $region1: #{tpu_custom_call.1} parent=0
    #allocation3 [shape = 'u8[65536]{0}', space=vmem, size = 0x10000, scoped, tag = 'input window, operand 0, single buffered']
    #allocation4 [shape = 's32[1]{0}', space=sflag, size = 0x4, scoped, tag = 'scoped memory for tpu_custom_call.1']
    #allocation5 [shape = 's32[1]{0}', space=sflag, size = 0x4, scoped, tag = 'scoped memory for tpu_custom_call.1']
    #allocation6 [shape = 'u8[512]{0}', space=vmem, size = 0x400, scoped, tag = 'input window, operand 1, single buffered']
    #allocation7 [shape = 's32[1]{0}', space=sflag, size = 0x4, scoped, tag = 'scoped memory for tpu_custom_call.1']
    #allocation8 [shape = 'u8[16384]{0}', space=vmem, size = 0x4000, scoped, tag = 'input window, operand 3, single buffered']
    #allocation9 [shape = 'u8[16384]{0}', space=vmem, size = 0x4000, scoped, tag = 'input window, operand 4, single buffered']
    #allocation10 [shape = 's32[1]{0}', space=sflag, size = 0x4, scoped, tag = 'scoped memory for tpu_custom_call.1']
    #allocation11 [shape = 'u8[16384]{0}', space=vmem, size = 0x4000, scoped, tag = 'output window, operand 0, single buffered']
    #allocation12 [shape = 'u8[16384]{0}', space=vmem, size = 0x4000, scoped, tag = 'output window, operand 1, single buffered']
    #allocation13 [shape = 's32[1]{0}', space=sflag, size = 0x4, scoped, tag = 'scoped memory for tpu_custom_call.1']
    %12 = vsyncpa [#allocation4], 0
    %13 = vsyncpa [#allocation7], 0
    %14 = vsyncpa [#allocation10], 0
    %15 = vsyncpa [#allocation5], 0
    %16 = vsyncpa [#allocation13], 0
    // Predicated region
    $region2: #{tpu_custom_call.1} parent=1 // pred_check
      _
    $region3: #{tpu_custom_call.1} parent=1 // pred_check_branch
      %18 = sbr.rel (0) target = $region5
    $region4: #{tpu_custom_call.1} parent=1 // pred_region
      %20 = vsyncadd [#allocation4], 0
      %s21 = sshll.u32 %s0, 4
      %s22 = int_to_ptr.hbm [resolvable:$true] %s21
      %s23 = sshll.u32 [#allocation3], 4
      %s24 = int_to_ptr.vmem [resolvable:$true] %s23
      %29 = dma.hbm_to_vmem [thread:$0]  %s22, 2048, %s24, [#allocation4], 128, 128, 8
    $region5: #{tpu_custom_call.1} parent=1 // pred_fallthru
      _
    // Predicated region
    $region6: #{tpu_custom_call.1} parent=1 // pred_check
      _
    $region7: #{tpu_custom_call.1} parent=1 // pred_check_branch
      %31 = sbr.rel (0) target = $region9
    $region8: #{tpu_custom_call.1} parent=1 // pred_region
      %33 = vsyncadd [#allocation7], 0
      %s35 = sshll.u32 %s1, 4
      %s36 = int_to_ptr.hbm [resolvable:$true] %s35
      %s37 = sshll.u32 [#allocation6], 4
      %s38 = int_to_ptr.vmem [resolvable:$true] %s37
      %40 = dma.hbm_to_vmem [thread:$0]  %s36, 16, %s38, [#allocation7]
    $region9: #{tpu_custom_call.1} parent=1 // pred_fallthru
      _
    // Predicated region
    $region10: #{tpu_custom_call.1} parent=1 // pred_check
      _
    $region11: #{tpu_custom_call.1} parent=1 // pred_check_branch
      %42 = sbr.rel (0) target = $region13
    $region12: #{tpu_custom_call.1} parent=1 // pred_region
      _
    $region13: #{tpu_custom_call.1} parent=1 // pred_fallthru
      _
    // Predicated region
    $region14: #{tpu_custom_call.1} parent=1 // pred_check
      _
    $region15: #{tpu_custom_call.1} parent=1 // pred_check_branch
      %44 = sbr.rel (0) target = $region17
    $region16: #{tpu_custom_call.1} parent=1 // pred_region
      %46 = vsyncadd [#allocation7], 0
      %s47 = sshll.u32 %s3, 4
      %s48 = int_to_ptr.hbm [resolvable:$true] %s47
      %s49 = sshll.u32 [#allocation8], 4
      %s50 = int_to_ptr.vmem [resolvable:$true] %s49
      %55 = dma.hbm_to_vmem [thread:$0]  %s48, 512, %s50, [#allocation7], 128, 128, 8
    $region17: #{tpu_custom_call.1} parent=1 // pred_fallthru
      _
    // Predicated region
    $region18: #{tpu_custom_call.1} parent=1 // pred_check
      _
    $region19: #{tpu_custom_call.1} parent=1 // pred_check_branch
      %57 = sbr.rel (0) target = $region21
    $region20: #{tpu_custom_call.1} parent=1 // pred_region
      %59 = vsyncadd [#allocation10], 0
      %s60 = sshll.u32 %s4, 4
      %s61 = int_to_ptr.hbm [resolvable:$true] %s60
      %s62 = sshll.u32 [#allocation9], 4
      %s63 = int_to_ptr.vmem [resolvable:$true] %s62
      %68 = dma.hbm_to_vmem [thread:$0]  %s61, 512, %s63, [#allocation10], 128, 128, 8
    $region21: #{tpu_custom_call.1} parent=1 // pred_fallthru
      _
    // Predicated region
    $region22: #{tpu_custom_call.1} parent=1 // pred_check
      _
    $region23: #{tpu_custom_call.1} parent=1 // pred_check_branch
      %70 = sbr.rel (0) target = $region25
    $region24: #{tpu_custom_call.1} parent=1 // pred_region
      %72 = dma.done [#allocation4], 2048
    $region25: #{tpu_custom_call.1} parent=1 // pred_fallthru
      _
    // Predicated region
    $region26: #{tpu_custom_call.1} parent=1 // pred_check
      _
    $region27: #{tpu_custom_call.1} parent=1 // pred_check_branch
      %74 = sbr.rel (0) target = $region29
    $region28: #{tpu_custom_call.1} parent=1 // pred_region
      %76 = dma.done [#allocation7], 16
    $region29: #{tpu_custom_call.1} parent=1 // pred_fallthru
      _
    // Predicated region
    $region30: #{tpu_custom_call.1} parent=1 // pred_check
      _
    $region31: #{tpu_custom_call.1} parent=1 // pred_check_branch
      %78 = sbr.rel (0) target = $region33
    $region32: #{tpu_custom_call.1} parent=1 // pred_region
      %80 = dma.done [#allocation7], 512
    $region33: #{tpu_custom_call.1} parent=1 // pred_fallthru
      _
    // Predicated region
    $region34: #{tpu_custom_call.1} parent=1 // pred_check
      _
    $region35: #{tpu_custom_call.1} parent=1 // pred_check_branch
      %82 = sbr.rel (0) target = $region37
    $region36: #{tpu_custom_call.1} parent=1 // pred_region
      %84 = dma.done [#allocation10], 512
    $region37: #{tpu_custom_call.1} parent=1 // pred_fallthru
      _
    %v85 = vld [vmem:[#allocation8] sm:$0xff]
    %v86 = vld [vmem:[#allocation8 + $0x8] sm:$0xff]
    %v87 = vld [vmem:[#allocation8 + $0x10] sm:$0xff]
    %v88 = vld [vmem:[#allocation8 + $0x18] sm:$0xff]
    %v89 = vld [vmem:[#allocation9] sm:$0xff]
    %v90 = vld [vmem:[#allocation9 + $0x8] sm:$0xff]
    %v91 = vld [vmem:[#allocation9 + $0x10] sm:$0xff]
    %v92 = vld [vmem:[#allocation9 + $0x18] sm:$0xff]
    %v93 = vld [vmem:[#allocation3] sm:$0xff]
    %v94 = vld [vmem:[#allocation3 + $0x8] sm:$0xff]
    %v95 = vld [vmem:[#allocation3 + $0x10] sm:$0xff]
    %v96 = vld [vmem:[#allocation3 + $0x18] sm:$0xff]
    %97 = vxpose.xlu0.b32.start [1/16] %v93, 128
    %98 = vxpose.xlu0.b32.cont [2/16] %v94, 128
    %99 = vxpose.xlu0.b32.cont [3/16] %v95, 128
    %100 = vxpose.xlu0.b32.cont [4/16] %v96, 128
    %101 = vxpose.xlu0.b32.cont [5/16] 0.0, 128
    %102 = vxpose.xlu0.b32.cont [6/16] 0.0, 128
    %103 = vxpose.xlu0.b32.cont [7/16] 0.0, 128
    %104 = vxpose.xlu0.b32.cont [8/16] 0.0, 128
    %105 = vxpose.xlu0.b32.cont [9/16] 0.0, 128
    %106 = vxpose.xlu0.b32.cont [10/16] 0.0, 128
    %107 = vxpose.xlu0.b32.cont [11/16] 0.0, 128
    %108 = vxpose.xlu0.b32.cont [12/16] 0.0, 128
    %109 = vxpose.xlu0.b32.cont [13/16] 0.0, 128
    %110 = vxpose.xlu0.b32.cont [14/16] 0.0, 128
    %111 = vxpose.xlu0.b32.cont [15/16] 0.0, 128
    %112 = vxpose.xlu0.b32.end [16/16] 0.0, 128
    %v113 = vpop.trf.xlu0
    %v114 = vpop.trf.xlu0
    %v115 = vpop.trf.xlu0
    %v116 = vpop.trf.xlu0
    %v117 = vpop.trf.xlu0
    %v118 = vpop.trf.xlu0
    %v119 = vpop.trf.xlu0
    %v120 = vpop.trf.xlu0
    %v121 = vpop.trf.xlu0
    %v122 = vpop.trf.xlu0
    %v123 = vpop.trf.xlu0
    %v124 = vpop.trf.xlu0
    %v125 = vpop.trf.xlu0
    %v126 = vpop.trf.xlu0
    %v127 = vpop.trf.xlu0
    %v128 = vpop.trf.xlu0
    %v129 = vadd.f32 %v93, %v113
    %v130 = vadd.f32 %v94, %v114
    %v131 = vadd.f32 %v95, %v115
    %v132 = vadd.f32 %v96, %v116
    %vm133 = vcmask 261120
    %134 = vst.msk [vmem:[#allocation2] sm:$0xff] %vm133, %v129
    %135 = vst.msk [vmem:[#allocation2 + $0x8] sm:$0xff] %vm133, %v130
    %136 = vst.msk [vmem:[#allocation2 + $0x10] sm:$0xff] %vm133, %v131
    %137 = vst.msk [vmem:[#allocation2 + $0x18] sm:$0xff] %vm133, %v132
    %v138 = vld [vmem:[#allocation2] sm:$0xff]
    %v139 = vld [vmem:[#allocation2 + $0x8] sm:$0xff]
    %v140 = vld [vmem:[#allocation2 + $0x10] sm:$0xff]
    %v141 = vld [vmem:[#allocation2 + $0x18] sm:$0xff]
    %v143 = vsel %vm133, %v89, 0
    %v146 = vsel %vm133, %v90, 0
    %v149 = vsel %vm133, %v91, 0
    %v152 = vsel %vm133, %v92, 0
    %154 = vmatpush.msra.mxu0 0.0
    %155 = vmatpush.msra.mxu0 0.0
    %156 = vmatpush.msra.mxu0 0.0
    %157 = vmatpush.msra.mxu0 0.0
    %158 = vmatpush.msra.mxu0 0.0
    %159 = vmatpush.msra.mxu0 0.0
    %160 = vmatpush.msra.mxu0 0.0
    %161 = vmatpush.msra.mxu0 0.0
    %162 = vmatpush.msra.mxu0 0.0
    %163 = vmatpush.msra.mxu0 0.0
    %164 = vmatpush.msra.mxu0 0.0
    %165 = vmatpush.msra.mxu0 0.0
    %166 = vmatpush.msra.mxu0 %v141
    %167 = vmatpush.msra.mxu0 %v140
    %168 = vmatpush.msra.mxu0 %v139
    %169 = vmatpush.msra.mxu0 %v138
    %170 = vmatmul.f32.gmra.mxu0 %v143
    %v171 = vpop.f32.mrf.mxu0
    %v172 = vadd.f32 0.0, %v171
    %173 = vmatmul.f32.gmra.mxu0 %v146
    %v174 = vpop.f32.mrf.mxu0
    %v175 = vadd.f32 0.0, %v174
    %176 = vmatmul.f32.gmra.mxu0 %v149
    %v177 = vpop.f32.mrf.mxu0
    %v178 = vadd.f32 0.0, %v177
    %179 = vmatmul.f32.gmra.mxu0 %v152
    %v180 = vpop.f32.mrf.mxu0
    %v181 = vadd.f32 0.0, %v180
    %182 = vdwg.mxu0
    %v183 = vadd.f32 %v85, %v172
    %v184 = vadd.f32 %v86, %v175
    %v185 = vadd.f32 %v87, %v178
    %v186 = vadd.f32 %v88, %v181
    %s187 = scalar_lea.vmem [#allocation3], 32
    %v188 = vld [vmem:[%s187] sm:$0xff]
    %v189 = vld [vmem:[%s187 + $0x8] sm:$0xff]
    %v190 = vld [vmem:[%s187 + $0x10] sm:$0xff]
    %v191 = vld [vmem:[%s187 + $0x18] sm:$0xff]
    %192 = vxpose.xlu0.b32.start [1/16] %v188, 128
    %193 = vxpose.xlu0.b32.cont [2/16] %v189, 128
    %194 = vxpose.xlu0.b32.cont [3/16] %v190, 128
    %195 = vxpose.xlu0.b32.cont [4/16] %v191, 128
    %196 = vxpose.xlu0.b32.cont [5/16] 0.0, 128
    %197 = vxpose.xlu0.b32.cont [6/16] 0.0, 128
    %198 = vxpose.xlu0.b32.cont [7/16] 0.0, 128
    %199 = vxpose.xlu0.b32.cont [8/16] 0.0, 128
    %200 = vxpose.xlu0.b32.cont [9/16] 0.0, 128
    %201 = vxpose.xlu0.b32.cont [10/16] 0.0, 128
    %202 = vxpose.xlu0.b32.cont [11/16] 0.0, 128
    %203 = vxpose.xlu0.b32.cont [12/16] 0.0, 128
    %204 = vxpose.xlu0.b32.cont [13/16] 0.0, 128
    %205 = vxpose.xlu0.b32.cont [14/16] 0.0, 128
    %206 = vxpose.xlu0.b32.cont [15/16] 0.0, 128
    %207 = vxpose.xlu0.b32.end [16/16] 0.0, 128
    %v208 = vpop.trf.xlu0
    %v209 = vpop.trf.xlu0
    %v210 = vpop.trf.xlu0
    %v211 = vpop.trf.xlu0
    %v212 = vpop.trf.xlu0
    %v213 = vpop.trf.xlu0
    %v214 = vpop.trf.xlu0
    %v215 = vpop.trf.xlu0
    %v216 = vpop.trf.xlu0
    %v217 = vpop.trf.xlu0
    %v218 = vpop.trf.xlu0
    %v219 = vpop.trf.xlu0
    %v220 = vpop.trf.xlu0
    %v221 = vpop.trf.xlu0
    %v222 = vpop.trf.xlu0
    %v223 = vpop.trf.xlu0
    %v224 = vadd.f32 %v188, %v208
    %v225 = vadd.f32 %v189, %v209
    %v226 = vadd.f32 %v190, %v210
    %v227 = vadd.f32 %v191, %v211
    %228 = vst.msk [vmem:[#allocation2] sm:$0xff] %vm133, %v224
    %229 = vst.msk [vmem:[#allocation2 + $0x8] sm:$0xff] %vm133, %v225
    %230 = vst.msk [vmem:[#allocation2 + $0x10] sm:$0xff] %vm133, %v226
    %231 = vst.msk [vmem:[#allocation2 + $0x18] sm:$0xff] %vm133, %v227
    %v232 = vld [vmem:[#allocation2] sm:$0xff]
    %v233 = vld [vmem:[#allocation2 + $0x8] sm:$0xff]
    %v234 = vld [vmem:[#allocation2 + $0x10] sm:$0xff]
    %v235 = vld [vmem:[#allocation2 + $0x18] sm:$0xff]
    %v237 = vsel %vm133, %v183, 0
    %v240 = vsel %vm133, %v184, 0
    %v243 = vsel %vm133, %v185, 0
    %v246 = vsel %vm133, %v186, 0
    %248 = vmatpush.msra.mxu0 0.0
    %249 = vmatpush.msra.mxu0 0.0
    %250 = vmatpush.msra.mxu0 0.0
    %251 = vmatpush.msra.mxu0 0.0
    %252 = vmatpush.msra.mxu0 0.0
    %253 = vmatpush.msra.mxu0 0.0
    %254 = vmatpush.msra.mxu0 0.0
    %255 = vmatpush.msra.mxu0 0.0
    %256 = vmatpush.msra.mxu0 0.0
    %257 = vmatpush.msra.mxu0 0.0
    %258 = vmatpush.msra.mxu0 0.0
    %259 = vmatpush.msra.mxu0 0.0
    %260 = vmatpush.msra.mxu0 %v235
    %261 = vmatpush.msra.mxu0 %v234
    %262 = vmatpush.msra.mxu0 %v233
    %263 = vmatpush.msra.mxu0 %v232
    %264 = vmatmul.f32.gmra.mxu0 %v237
    %v265 = vpop.f32.mrf.mxu0
    %v266 = vadd.f32 0.0, %v265
    %267 = vmatmul.f32.gmra.mxu0 %v240
    %v268 = vpop.f32.mrf.mxu0
    %v269 = vadd.f32 0.0, %v268
    %270 = vmatmul.f32.gmra.mxu0 %v243
    %v271 = vpop.f32.mrf.mxu0
    %v272 = vadd.f32 0.0, %v271
    %273 = vmatmul.f32.gmra.mxu0 %v246
    %v274 = vpop.f32.mrf.mxu0
    %v275 = vadd.f32 0.0, %v274
    %276 = vdwg.mxu0
    %v277 = vadd.f32 %v89, %v266
    %v278 = vadd.f32 %v90, %v269
    %v279 = vadd.f32 %v91, %v272
    %v280 = vadd.f32 %v92, %v275
    %s281 = scalar_lea.vmem [#allocation3], 64
    %v282 = vld [vmem:[%s281] sm:$0xff]
    %v283 = vld [vmem:[%s281 + $0x8] sm:$0xff]
    %v284 = vld [vmem:[%s281 + $0x10] sm:$0xff]
    %v285 = vld [vmem:[%s281 + $0x18] sm:$0xff]
    %286 = vxpose.xlu0.b32.start [1/16] %v282, 128
    %287 = vxpose.xlu0.b32.cont [2/16] %v283, 128
    %288 = vxpose.xlu0.b32.cont [3/16] %v284, 128
    %289 = vxpose.xlu0.b32.cont [4/16] %v285, 128
    %290 = vxpose.xlu0.b32.cont [5/16] 0.0, 128
    %291 = vxpose.xlu0.b32.cont [6/16] 0.0, 128
    %292 = vxpose.xlu0.b32.cont [7/16] 0.0, 128
    %293 = vxpose.xlu0.b32.cont [8/16] 0.0, 128
    %294 = vxpose.xlu0.b32.cont [9/16] 0.0, 128
    %295 = vxpose.xlu0.b32.cont [10/16] 0.0, 128
    %296 = vxpose.xlu0.b32.cont [11/16] 0.0, 128
    %297 = vxpose.xlu0.b32.cont [12/16] 0.0, 128
    %298 = vxpose.xlu0.b32.cont [13/16] 0.0, 128
    %299 = vxpose.xlu0.b32.cont [14/16] 0.0, 128
    %300 = vxpose.xlu0.b32.cont [15/16] 0.0, 128
    %301 = vxpose.xlu0.b32.end [16/16] 0.0, 128
    %v302 = vpop.trf.xlu0
    %v303 = vpop.trf.xlu0
    %v304 = vpop.trf.xlu0
    %v305 = vpop.trf.xlu0
    %v306 = vpop.trf.xlu0
    %v307 = vpop.trf.xlu0
    %v308 = vpop.trf.xlu0
    %v309 = vpop.trf.xlu0
    %v310 = vpop.trf.xlu0
    %v311 = vpop.trf.xlu0
    %v312 = vpop.trf.xlu0
    %v313 = vpop.trf.xlu0
    %v314 = vpop.trf.xlu0
    %v315 = vpop.trf.xlu0
    %v316 = vpop.trf.xlu0
    %v317 = vpop.trf.xlu0
    %v318 = vadd.f32 %v282, %v302
    %v319 = vadd.f32 %v283, %v303
    %v320 = vadd.f32 %v284, %v304
    %v321 = vadd.f32 %v285, %v305
    %322 = vst.msk [vmem:[#allocation2] sm:$0xff] %vm133, %v318
    %323 = vst.msk [vmem:[#allocation2 + $0x8] sm:$0xff] %vm133, %v319
    %324 = vst.msk [vmem:[#allocation2 + $0x10] sm:$0xff] %vm133, %v320
    %325 = vst.msk [vmem:[#allocation2 + $0x18] sm:$0xff] %vm133, %v321
    %v326 = vld [vmem:[#allocation2] sm:$0xff]
    %v327 = vld [vmem:[#allocation2 + $0x8] sm:$0xff]
    %v328 = vld [vmem:[#allocation2 + $0x10] sm:$0xff]
    %v329 = vld [vmem:[#allocation2 + $0x18] sm:$0xff]
    %v331 = vsel %vm133, %v277, 0
    %v334 = vsel %vm133, %v278, 0
    %v337 = vsel %vm133, %v279, 0
    %v340 = vsel %vm133, %v280, 0
    %342 = vmatpush.msra.mxu0 0.0
    %343 = vmatpush.msra.mxu0 0.0
    %344 = vmatpush.msra.mxu0 0.0
    %345 = vmatpush.msra.mxu0 0.0
    %346 = vmatpush.msra.mxu0 0.0
    %347 = vmatpush.msra.mxu0 0.0
    %348 = vmatpush.msra.mxu0 0.0
    %349 = vmatpush.msra.mxu0 0.0
    %350 = vmatpush.msra.mxu0 0.0
    %351 = vmatpush.msra.mxu0 0.0
    %352 = vmatpush.msra.mxu0 0.0
    %353 = vmatpush.msra.mxu0 0.0
    %354 = vmatpush.msra.mxu0 %v329
    %355 = vmatpush.msra.mxu0 %v328
    %356 = vmatpush.msra.mxu0 %v327
    %357 = vmatpush.msra.mxu0 %v326
    %358 = vmatmul.f32.gmra.mxu0 %v331
    %v359 = vpop.f32.mrf.mxu0
    %v360 = vadd.f32 0.0, %v359
    %361 = vmatmul.f32.gmra.mxu0 %v334
    %v362 = vpop.f32.mrf.mxu0
    %v363 = vadd.f32 0.0, %v362
    %364 = vmatmul.f32.gmra.mxu0 %v337
    %v365 = vpop.f32.mrf.mxu0
    %v366 = vadd.f32 0.0, %v365
    %367 = vmatmul.f32.gmra.mxu0 %v340
    %v368 = vpop.f32.mrf.mxu0
    %v369 = vadd.f32 0.0, %v368
    %370 = vdwg.mxu0
    %v371 = vadd.f32 %v183, %v360
    %v372 = vadd.f32 %v184, %v363
    %v373 = vadd.f32 %v185, %v366
    %v374 = vadd.f32 %v186, %v369
    %s375 = scalar_lea.vmem [#allocation3], 96
    %v376 = vld [vmem:[%s375] sm:$0xff]
    %v377 = vld [vmem:[%s375 + $0x8] sm:$0xff]
    %v378 = vld [vmem:[%s375 + $0x10] sm:$0xff]
    %v379 = vld [vmem:[%s375 + $0x18] sm:$0xff]
    %380 = vxpose.xlu0.b32.start [1/16] %v376, 128
    %381 = vxpose.xlu0.b32.cont [2/16] %v377, 128
    %382 = vxpose.xlu0.b32.cont [3/16] %v378, 128
    %383 = vxpose.xlu0.b32.cont [4/16] %v379, 128
    %384 = vxpose.xlu0.b32.cont [5/16] 0.0, 128
    %385 = vxpose.xlu0.b32.cont [6/16] 0.0, 128
    %386 = vxpose.xlu0.b32.cont [7/16] 0.0, 128
    %387 = vxpose.xlu0.b32.cont [8/16] 0.0, 128
    %388 = vxpose.xlu0.b32.cont [9/16] 0.0, 128
    %389 = vxpose.xlu0.b32.cont [10/16] 0.0, 128
    %390 = vxpose.xlu0.b32.cont [11/16] 0.0, 128
    %391 = vxpose.xlu0.b32.cont [12/16] 0.0, 128
    %392 = vxpose.xlu0.b32.cont [13/16] 0.0, 128
    %393 = vxpose.xlu0.b32.cont [14/16] 0.0, 128
    %394 = vxpose.xlu0.b32.cont [15/16] 0.0, 128
    %395 = vxpose.xlu0.b32.end [16/16] 0.0, 128
    %v396 = vpop.trf.xlu0
    %v397 = vpop.trf.xlu0
    %v398 = vpop.trf.xlu0
    %v399 = vpop.trf.xlu0
    %v400 = vpop.trf.xlu0
    %v401 = vpop.trf.xlu0
    %v402 = vpop.trf.xlu0
    %v403 = vpop.trf.xlu0
    %v404 = vpop.trf.xlu0
    %v405 = vpop.trf.xlu0
    %v406 = vpop.trf.xlu0
    %v407 = vpop.trf.xlu0
    %v408 = vpop.trf.xlu0
    %v409 = vpop.trf.xlu0
    %v410 = vpop.trf.xlu0
    %v411 = vpop.trf.xlu0
    %v412 = vadd.f32 %v376, %v396
    %v413 = vadd.f32 %v377, %v397
    %v414 = vadd.f32 %v378, %v398
    %v415 = vadd.f32 %v379, %v399
    %416 = vst.msk [vmem:[#allocation2] sm:$0xff] %vm133, %v412
    %417 = vst.msk [vmem:[#allocation2 + $0x8] sm:$0xff] %vm133, %v413
    %418 = vst.msk [vmem:[#allocation2 + $0x10] sm:$0xff] %vm133, %v414
    %419 = vst.msk [vmem:[#allocation2 + $0x18] sm:$0xff] %vm133, %v415
    %v420 = vld [vmem:[#allocation2] sm:$0xff]
    %v421 = vld [vmem:[#allocation2 + $0x8] sm:$0xff]
    %v422 = vld [vmem:[#allocation2 + $0x10] sm:$0xff]
    %v423 = vld [vmem:[#allocation2 + $0x18] sm:$0xff]
    %v425 = vsel %vm133, %v371, 0
    %v428 = vsel %vm133, %v372, 0
    %v431 = vsel %vm133, %v373, 0
    %v434 = vsel %vm133, %v374, 0
    %436 = vmatpush.msra.mxu0 0.0
    %437 = vmatpush.msra.mxu0 0.0
    %438 = vmatpush.msra.mxu0 0.0
    %439 = vmatpush.msra.mxu0 0.0
    %440 = vmatpush.msra.mxu0 0.0
    %441 = vmatpush.msra.mxu0 0.0
    %442 = vmatpush.msra.mxu0 0.0
    %443 = vmatpush.msra.mxu0 0.0
    %444 = vmatpush.msra.mxu0 0.0
    %445 = vmatpush.msra.mxu0 0.0
    %446 = vmatpush.msra.mxu0 0.0
    %447 = vmatpush.msra.mxu0 0.0
    %448 = vmatpush.msra.mxu0 %v423
    %449 = vmatpush.msra.mxu0 %v422
    %450 = vmatpush.msra.mxu0 %v421
    %451 = vmatpush.msra.mxu0 %v420
    %452 = vmatmul.f32.gmra.mxu0 %v425
    %v453 = vpop.f32.mrf.mxu0
    %v454 = vadd.f32 0.0, %v453
    %455 = vmatmul.f32.gmra.mxu0 %v428
    %v456 = vpop.f32.mrf.mxu0
    %v457 = vadd.f32 0.0, %v456
    %458 = vmatmul.f32.gmra.mxu0 %v431
    %v459 = vpop.f32.mrf.mxu0
    %v460 = vadd.f32 0.0, %v459
    %461 = vmatmul.f32.gmra.mxu0 %v434
    %v462 = vpop.f32.mrf.mxu0
    %v463 = vadd.f32 0.0, %v462
    %464 = vdwg.mxu0
    %v465 = vadd.f32 %v277, %v454
    %v466 = vadd.f32 %v278, %v457
    %v467 = vadd.f32 %v279, %v460
    %v468 = vadd.f32 %v280, %v463
    %v469 = vld [vmem:[#allocation6] sm:$0x1]
    %v471 = vperm.slane %v469, 0
    %v473 = vadd.f32 %v371, %v471
    %v474 = vadd.f32 %v372, %v471
    %v475 = vadd.f32 %v373, %v471
    %v476 = vadd.f32 %v374, %v471
    %477 = vst.msk [vmem:[#allocation11] sm:$0xff] %vm133, %v473
    %478 = vst.msk [vmem:[#allocation11 + $0x8] sm:$0xff] %vm133, %v474
    %479 = vst.msk [vmem:[#allocation11 + $0x10] sm:$0xff] %vm133, %v475
    %480 = vst.msk [vmem:[#allocation11 + $0x18] sm:$0xff] %vm133, %v476
    %v481 = vld [vmem:[%s2] sm:$0x1]
    %v483 = vperm.slane %v481, 0
    %v485 = vadd.f32 %v465, %v483
    %v486 = vadd.f32 %v466, %v483
    %v487 = vadd.f32 %v467, %v483
    %v488 = vadd.f32 %v468, %v483
    %489 = vst.msk [vmem:[#allocation12] sm:$0xff] %vm133, %v485
    %490 = vst.msk [vmem:[#allocation12 + $0x8] sm:$0xff] %vm133, %v486
    %491 = vst.msk [vmem:[#allocation12 + $0x10] sm:$0xff] %vm133, %v487
    %492 = vst.msk [vmem:[#allocation12 + $0x18] sm:$0xff] %vm133, %v488
    // Predicated region
    $region38: #{tpu_custom_call.1} parent=1 // pred_check
      _
    $region39: #{tpu_custom_call.1} parent=1 // pred_check_branch
      %494 = sbr.rel (0) target = $region41
    $region40: #{tpu_custom_call.1} parent=1 // pred_region
      %496 = vsyncadd [#allocation5], 0
      %s497 = sshll.u32 [#allocation11], 4
      %s498 = int_to_ptr.vmem [resolvable:$true] %s497
      %s499 = sshll.u32 %s5, 4
      %s500 = int_to_ptr.hbm [resolvable:$true] %s499
      %505 = dma.vmem_to_hbm [thread:$0]  %s498, 512, %s500, [#allocation5], 128, 128, 8
    $region41: #{tpu_custom_call.1} parent=1 // pred_fallthru
      _
    // Predicated region
    $region42: #{tpu_custom_call.1} parent=1 // pred_check
      _
    $region43: #{tpu_custom_call.1} parent=1 // pred_check_branch
      %507 = sbr.rel (0) target = $region45
    $region44: #{tpu_custom_call.1} parent=1 // pred_region
      %509 = vsyncadd [#allocation13], 0
      %s510 = sshll.u32 [#allocation12], 4
      %s511 = int_to_ptr.vmem [resolvable:$true] %s510
      %s512 = sshll.u32 %s6, 4
      %s513 = int_to_ptr.hbm [resolvable:$true] %s512
      %518 = dma.vmem_to_hbm [thread:$0]  %s511, 512, %s513, [#allocation13], 128, 128, 8
    $region45: #{tpu_custom_call.1} parent=1 // pred_fallthru
      _
    // Predicated region
    $region46: #{tpu_custom_call.1} parent=1 // pred_check
      _
    $region47: #{tpu_custom_call.1} parent=1 // pred_check_branch
      %520 = sbr.rel (0) target = $region49
    $region48: #{tpu_custom_call.1} parent=1 // pred_region
      %522 = dma.done [#allocation5], 512
    $region49: #{tpu_custom_call.1} parent=1 // pred_fallthru
      _
    // Predicated region
    $region50: #{tpu_custom_call.1} parent=1 // pred_check
      _
    $region51: #{tpu_custom_call.1} parent=1 // pred_check_branch
      %524 = sbr.rel (0) target = $region53
    $region52: #{tpu_custom_call.1} parent=1 // pred_region
      %526 = dma.done [#allocation13], 512
    $region53: #{tpu_custom_call.1} parent=1 // pred_fallthru
      _
    %527 = vsyncpa [#allocation4], 1
    %528 = vsyncpa [#allocation7], 1
    %529 = vsyncpa [#allocation10], 1
    %530 = vsyncpa [#allocation5], 1
    %531 = vsyncpa [#allocation13], 1

</llo_original>
